<compile_context>
chip_gen: v7x
topology: tpu7x:2x2x1
jax: 0.10.0
libtpu: 0.0.40
codegen_flags: <defaults>
</compile_context>

<pallas_src>
import jax
import jax.numpy as jnp
from jax.experimental import pallas as pl
from jax.experimental.pallas import tpu as pltpu


# ---------------------------------------------------------------------------
# Hardware-aware budgets.
# ---------------------------------------------------------------------------
def _vmem_capacity_bytes():
    try:
        return int(pltpu.get_tpu_info().vmem_capacity_bytes)
    except Exception:
        return 64 * 1024 * 1024        # conservative (v7x-sized) fallback


def _clamp_vmem_limit(wanted_bytes, vmem_cap):
    """Scoped-VMEM limit: >= 32 MiB, <= physical cap minus 16 MiB headroom."""
    hi = max(vmem_cap - (16 << 20), 32 << 20)
    return int(min(max(wanted_bytes, 32 << 20), hi))


def _pick_hw_tile(hw, c, max_block_bytes):
    """Lane-tile for the HW axis: largest multiple of 128 whose (C, T) f32
    block fits the per-stream budget.  Prefers an exact divisor of HW;
    otherwise the last block is ragged and relies on Pallas bounds masking
    (all kernel math is per-lane, so stale edge lanes are inert)."""
    cap = (max_block_bytes // (4 * c)) // 128 * 128
    cap = max(128, cap)                # floor; vmem_limit derives from actual block
    if hw <= cap:
        return hw                      # one full-row tile (always legal)
    for t in range(cap, 127, -128):
        if hw % t == 0:
            return t                   # exact tiling, no remainder
    # TODO(synk): for extreme C (C*128*4B > budget) tile the channel axis with
    # an "arbitrary" reduction grid dim instead of relying on a bigger limit.
    return cap


# ---------------------------------------------------------------------------
# FUSED kernel: grid=(B,), full (C, HW) slab resident per batch.
# pool + FilterLayer MLPs + gate fold + pixel math, single HBM pass.
# ---------------------------------------------------------------------------
def sagate_fused_kernel(rgb_ref, hha_ref,
                        w1g_r_ref, w1m_r_ref, b1_r_ref, w2t_r_ref, b2t_r_ref,
                        w1g_h_ref, w1m_h_ref, b1_h_ref, w2t_h_ref, b2t_h_ref,
                        wd_r_ref, wd_h_ref, bdiff_ref,
                        rgb_out_ref, hha_out_ref, merge_ref):
    rgb = rgb_ref[0]                                 # (C, HW) lane axis = pixels
    hha = hha_ref[0]                                 # (C, HW)
    inv_hw = 1.0 / rgb.shape[1]

    # AdaptiveAvgPool2d(1): lane (XLU) reduce over all pixels.
    mean_rgb = jnp.sum(rgb, axis=1, keepdims=True) * inv_hw     # (C, 1)
    mean_hha = jnp.sum(hha, axis=1, keepdims=True) * inv_hw     # (C, 1)

    def filter_gate(mean_guide, mean_main, w1g, w1m, b1, w2t, b2t):
        # Linear(2C->hidden)+ReLU, with the channel concat split into halves.
        h = jnp.sum(mean_guide * w1g, axis=0, keepdims=True)    # (1, hidden)
        h = h + jnp.sum(mean_main * w1m, axis=0, keepdims=True)
        h = jnp.maximum(h + b1, 0.0)
        # Linear(hidden->C)+Sigmoid, w2 pre-transposed to (C, hidden).
        return jax.nn.sigmoid(jnp.sum(h * w2t, axis=1, keepdims=True) + b2t)

    # fsp_rgb: guide = hha, main = rgb.   fsp_hha: guide = rgb, main = hha.
    cw_rgb = filter_gate(mean_hha, mean_rgb, w1g_r_ref[...], w1m_r_ref[...],
                         b1_r_ref[...], w2t_r_ref[...], b2t_r_ref[...])
    cw_hha = filter_gate(mean_rgb, mean_hha, w1g_h_ref[...], w1m_h_ref[...],
                         b1_h_ref[...], w2t_h_ref[...], b2t_h_ref[...])

    # Fold FSP recombination into the two 1x1 gate convs:
    #   gate_rgb(cat_fea) - gate_hha(cat_fea) = u_rgb.rgb + u_hha.hha + b_diff
    wd_r = wd_r_ref[...]                             # (C, 1)
    wd_h = wd_h_ref[...]                             # (C, 1)
    u_rgb = wd_r + wd_h * cw_hha
    u_hha = wd_h + wd_r * cw_rgb

    d = jnp.sum(rgb * u_rgb + hha * u_hha, axis=0, keepdims=True) + bdiff_ref[0, 0]
    a_l = jax.nn.sigmoid(d)                          # 2-way softmax == sigmoid(diff)
    merge = rgb * a_l + hha * (1.0 - a_l)
    merge_ref[0] = merge
    rgb_out_ref[0] = jnp.maximum((rgb + merge) * 0.5, 0.0)
    hha_out_ref[0] = jnp.maximum((hha + merge) * 0.5, 0.0)


# ---------------------------------------------------------------------------
# TILED pixel kernel: one (batch, HW-tile) block of shape (C, T) per step.
# ---------------------------------------------------------------------------
def sagate_pixel_kernel(rgb_ref, hha_ref, u_rgb_ref, u_hha_ref, bdiff_ref,
                        rgb_out_ref, hha_out_ref, merge_ref):
    rgb = rgb_ref[0]              # (C, T)  lane axis = pixels
    hha = hha_ref[0]              # (C, T)
    u_r = u_rgb_ref[0]            # (C, 1)  per-batch effective gate weights
    u_h = u_hha_ref[0]            # (C, 1)

    d = jnp.sum(rgb * u_r + hha * u_h, axis=0, keepdims=True) + bdiff_ref[0, 0]
    a_l = jax.nn.sigmoid(d)       # (1, T)
    a_r = 1.0 - a_l

    merge = rgb * a_l + hha * a_r
    merge_ref[0] = merge
    rgb_out_ref[0] = jnp.maximum((rgb + merge) * 0.5, 0.0)
    hha_out_ref[0] = jnp.maximum((hha + merge) * 0.5, 0.0)


# ---------------------------------------------------------------------------
# Wrapper.
# ---------------------------------------------------------------------------
def sagate_forward(rgb_nchw, hha_nchw, params, *, force_tiled=False,
                   max_block_bytes=None):
    """rgb/hha: (B, C, H, W) float32. Returns ([rgb_out, hha_out], merge) NCHW."""
    B, C, H, W = rgb_nchw.shape
    HW = H * W

    # Free layout change: NCHW -> (B, C, HW); HW on the lane axis.
    rgb = rgb_nchw.reshape(B, C, HW)
    hha = hha_nchw.reshape(B, C, HW)

    vmem_cap = _vmem_capacity_bytes()

    # Gate-conv difference weights shared by both paths.
    wd = params["gate_w"][:, 0] - params["gate_w"][:, 1]          # (2C,)
    wd_rgb, wd_hha = wd[:C], wd[C:]
    b_diff = (params["gate_b"][0, 0] - params["gate_b"][0, 1]
              ).reshape(1, 1).astype(jnp.float32)

    out_shape = tuple(jax.ShapeDtypeStruct((B, C, HW), jnp.float32)
                      for _ in range(3))
    back = lambda x: x.reshape(B, C, H, W)                        # free reshape

    slab_bytes = C * HW * 4
    # ~14 slabs: 5 streams x 2 pipeline buffers + in-body elementwise temps.
    fused_fits = 14 * slab_bytes <= int(vmem_cap * 0.7)

    if fused_fits and not force_tiled:
        # ---- FUSED path: single HBM pass (2 reads + 3 writes) ----
        hidden = params["w1_rgb"].shape[1]
        w1g_r, w1m_r = params["w1_rgb"][:C], params["w1_rgb"][C:]  # (C, hidden)
        w1g_h, w1m_h = params["w1_hha"][:C], params["w1_hha"][C:]
        b1_r = params["b1_rgb"].reshape(1, hidden)
        b1_h = params["b1_hha"].reshape(1, hidden)
        w2t_r = params["w2_rgb"].T                                 # (C, hidden)
        w2t_h = params["w2_hha"].T
        b2t_r = params["b2_rgb"].reshape(C, 1)
        b2t_h = params["b2_hha"].reshape(C, 1)
        wd_r = wd_rgb.reshape(C, 1)
        wd_h = wd_hha.reshape(C, 1)

        px_spec = pl.BlockSpec((1, C, HW), lambda b: (b, 0, 0))

        def const_spec(arr):          # batch-invariant weights, stay resident
            zeros = (0,) * arr.ndim
            return pl.BlockSpec(arr.shape, lambda b: zeros)

        weights = (w1g_r, w1m_r, b1_r, w2t_r, b2t_r,
                   w1g_h, w1m_h, b1_h, w2t_h, b2t_h, wd_r, wd_h)
        in_specs = ([px_spec, px_spec]
                    + [const_spec(w) for w in weights]
                    + [pl.BlockSpec(memory_space=pltpu.MemorySpace.SMEM)])

        vmem_limit = _clamp_vmem_limit(14 * slab_bytes + (4 << 20), vmem_cap)
        rgb_out, hha_out, merge = pl.pallas_call(
            sagate_fused_kernel,
            out_shape=out_shape,
            grid=(B,),
            in_specs=in_specs,
            out_specs=(px_spec, px_spec, px_spec),
            compiler_params=pltpu.CompilerParams(
                # TODO(synk): on v7x evaluate pltpu.CORE_PARALLEL on the batch
                # axis (or pl.core_map) so both TensorCores stream.
                dimension_semantics=("parallel",),
                vmem_limit_bytes=vmem_limit),
        )(rgb, hha, *weights, b_diff)
        return [back(rgb_out), back(hha_out)], back(merge)

    # ---- TILED fallback: XLA pool/MLP pass + HW-tiled Pallas pixel pass ----
    mean_rgb = jnp.mean(rgb, axis=2)                     # (B, C)
    mean_hha = jnp.mean(hha, axis=2)                     # (B, C)

    def filter_mlp(pooled, w1, b1, w2, b2):
        h = jnp.maximum(pooled @ w1 + b1, 0.0)
        return jax.nn.sigmoid(h @ w2 + b2)               # (B, C)

    cw_rgb = filter_mlp(jnp.concatenate([mean_hha, mean_rgb], axis=1),
                        params["w1_rgb"], params["b1_rgb"],
                        params["w2_rgb"], params["b2_rgb"])
    cw_hha = filter_mlp(jnp.concatenate([mean_rgb, mean_hha], axis=1),
                        params["w1_hha"], params["b1_hha"],
                        params["w2_hha"], params["b2_hha"])

    u_rgb = (wd_rgb[None, :] + wd_hha[None, :] * cw_hha).reshape(B, C, 1)
    u_hha = (wd_hha[None, :] + wd_rgb[None, :] * cw_rgb).reshape(B, C, 1)

    if max_block_bytes is None:
        # ~4 MiB/stream on 128-MiB-VMEM parts (v5e/v6e), ~2 MiB on v7x (64 MiB).
        max_block_bytes = (4 << 20) if vmem_cap >= (96 << 20) else (2 << 20)
    T = _pick_hw_tile(HW, C, max_block_bytes)
    block_bytes = C * T * 4
    vmem_limit = _clamp_vmem_limit(10 * block_bytes + (8 << 20), vmem_cap)

    grid = (B, pl.cdiv(HW, T))
    px_spec = pl.BlockSpec((1, C, T), lambda b, t: (b, 0, t))     # lane-dense
    cw_spec = pl.BlockSpec((1, C, 1), lambda b, t: (b, 0, 0))     # per batch
    bd_spec = pl.BlockSpec(memory_space=pltpu.MemorySpace.SMEM)   # scalar

    rgb_out, hha_out, merge = pl.pallas_call(
        sagate_pixel_kernel,
        out_shape=out_shape,
        grid=grid,
        in_specs=[px_spec, px_spec, cw_spec, cw_spec, bd_spec],
        out_specs=(px_spec, px_spec, px_spec),
        compiler_params=pltpu.CompilerParams(
            dimension_semantics=("parallel", "parallel"),
            vmem_limit_bytes=vmem_limit),
    )(rgb, hha, u_rgb, u_hha, b_diff)
    return [back(rgb_out), back(hha_out)], back(merge)


# ---------------------------------------------------------------------------
# Pure-JAX reference mirroring the PyTorch forward (NCHW, explicit softmax).
# ---------------------------------------------------------------------------
def sagate_reference(rgb_nchw, hha_nchw, params):
    def filter_layer(combined, w1, b1, w2, b2):
        y = jnp.mean(combined, axis=(2, 3))                       # (B, 2C)
        y = jnp.maximum(y @ w1 + b1, 0.0)
        y = jax.nn.sigmoid(y @ w2 + b2)                           # (B, C)
        return y[:, :, None, None]

    cw_r = filter_layer(jnp.concatenate([hha_nchw, rgb_nchw], axis=1),
                        params["w1_rgb"], params["b1_rgb"][0],
                        params["w2_rgb"], params["b2_rgb"][0])
    rec_rgb = rgb_nchw + cw_r * hha_nchw
    cw_h = filter_layer(jnp.concatenate([rgb_nchw, hha_nchw], axis=1),
                        params["w1_hha"], params["b1_hha"][0],
                        params["w2_hha"], params["b2_hha"][0])
    rec_hha = hha_nchw + cw_h * rgb_nchw

    cat_fea = jnp.concatenate([rec_rgb, rec_hha], axis=1)         # (B, 2C, H, W)
    logits = jnp.einsum('bchw,ck->bkhw', cat_fea, params["gate_w"]) \
        + params["gate_b"][0][None, :, None, None]                # (B, 2, H, W)
    attn = jax.nn.softmax(logits, axis=1)
    a_l, a_r = attn[:, 0:1], attn[:, 1:2]
    merge = rgb_nchw * a_l + hha_nchw * a_r
    rgb_out = jnp.maximum((rgb_nchw + merge) / 2, 0.0)
    hha_out = jnp.maximum((hha_nchw + merge) / 2, 0.0)
    return [rgb_out, hha_out], merge


def init_params(key, in_planes, out_planes, reduction):
    hidden = out_planes // reduction
    ks = jax.random.split(key, 10)
    s = 0.1
    return {
        "w1_rgb": s * jax.random.normal(ks[0], (2 * in_planes, hidden), jnp.float32),
        "b1_rgb": s * jax.random.normal(ks[1], (1, hidden), jnp.float32),
        "w2_rgb": s * jax.random.normal(ks[2], (hidden, out_planes), jnp.float32),
        "b2_rgb": s * jax.random.normal(ks[3], (1, out_planes), jnp.float32),
        "w1_hha": s * jax.random.normal(ks[4], (2 * in_planes, hidden), jnp.float32),
        "b1_hha": s * jax.random.normal(ks[5], (1, hidden), jnp.float32),
        "w2_hha": s * jax.random.normal(ks[6], (hidden, out_planes), jnp.float32),
        "b2_hha": s * jax.random.normal(ks[7], (1, out_planes), jnp.float32),
        # gate_rgb and gate_hha 1x1 convs (2C -> 1 each), fused as (2C, 2)
        "gate_w": s * jax.random.normal(ks[8], (2 * in_planes, 2), jnp.float32),
        "gate_b": s * jax.random.normal(ks[9], (1, 2), jnp.float32),
    }


if __name__ == "__main__":
    key = jax.random.PRNGKey(0)

    def run_case(B, C, H, W, reduction, case_key, **fwd_kwargs):
        k_rgb, k_hha, k_par = jax.random.split(case_key, 3)
        rgb = jax.random.normal(k_rgb, (B, C, H, W), jnp.float32)
        hha = jax.random.normal(k_hha, (B, C, H, W), jnp.float32)
        params = init_params(k_par, C, C, reduction)

        (rgb_out, hha_out), merge = sagate_forward(rgb, hha, params, **fwd_kwargs)
        jax.block_until_ready((rgb_out, hha_out, merge))

        (rgb_ref, hha_ref), merge_ref = sagate_reference(rgb, hha, params)
        for a, b in ((rgb_out, rgb_ref), (hha_out, hha_ref), (merge, merge_ref)):
            err = float(jnp.max(jnp.abs(a - b)))
            assert err < 1e-4, f"mismatch: max abs err {err}"

    # fused path: per-batch slab resident, single HBM pass, grid=(2,)
    run_case(B=2, C=16, H=16, W=16, reduction=4,
             case_key=jax.random.fold_in(key, 1))
    # tiled fallback path (forced): one full-row tile per batch
    run_case(B=1, C=32, H=64, W=64, reduction=8,
             case_key=jax.random.fold_in(key, 2), force_tiled=True)
    # tiled path with a ragged HW edge: HW=900, T=128 -> masked last block
    run_case(B=2, C=16, H=30, W=30, reduction=4,
             case_key=jax.random.fold_in(key, 3), force_tiled=True,
             max_block_bytes=128 * 16 * 4)

    print("KERNEL_OK")
</pallas_src>

<mosaic_0001>
module attributes {stable_mosaic.version = 11 : i64} {
  func.func @sagate_fused_kernel(%arg0: i32, %arg1: memref<1x16x256xf32, #tpu.memory_space<vmem>>, %arg2: memref<1x16x256xf32, #tpu.memory_space<vmem>>, %arg3: memref<16x4xf32, #tpu.memory_space<vmem>>, %arg4: memref<16x4xf32, #tpu.memory_space<vmem>>, %arg5: memref<1x4xf32, #tpu.memory_space<vmem>>, %arg6: memref<16x4xf32, #tpu.memory_space<vmem>>, %arg7: memref<16x1xf32, #tpu.memory_space<vmem>>, %arg8: memref<16x4xf32, #tpu.memory_space<vmem>>, %arg9: memref<16x4xf32, #tpu.memory_space<vmem>>, %arg10: memref<1x4xf32, #tpu.memory_space<vmem>>, %arg11: memref<16x4xf32, #tpu.memory_space<vmem>>, %arg12: memref<16x1xf32, #tpu.memory_space<vmem>>, %arg13: memref<16x1xf32, #tpu.memory_space<vmem>>, %arg14: memref<16x1xf32, #tpu.memory_space<vmem>>, %arg15: memref<1x1xf32, #tpu.memory_space<smem>>, %arg16: memref<1x16x256xf32, #tpu.memory_space<vmem>>, %arg17: memref<1x16x256xf32, #tpu.memory_space<vmem>>, %arg18: memref<1x16x256xf32, #tpu.memory_space<vmem>>) attributes {dimension_semantics = [#tpu.dimension_semantics<parallel>], iteration_bounds = array<i64: 2>, scalar_prefetch = 0 : i64, scratch_operands = 0 : i64, tpu.core_type = #tpu.core_type<tc>, window_params = [{transform_indices = @transform_0, window_bounds = array<i64: 1, 16, 256>}, {transform_indices = @transform_1, window_bounds = array<i64: 1, 16, 256>}, {pipeline_mode = #tpu.pipeline_mode<synchronous>, transform_indices = @transform_2, window_bounds = array<i64: 16, 4>}, {pipeline_mode = #tpu.pipeline_mode<synchronous>, transform_indices = @transform_3, window_bounds = array<i64: 16, 4>}, {pipeline_mode = #tpu.pipeline_mode<synchronous>, transform_indices = @transform_4, window_bounds = array<i64: 1, 4>}, {pipeline_mode = #tpu.pipeline_mode<synchronous>, transform_indices = @transform_5, window_bounds = array<i64: 16, 4>}, {pipeline_mode = #tpu.pipeline_mode<synchronous>, transform_indices = @transform_6, window_bounds = array<i64: 16, 1>}, {pipeline_mode = #tpu.pipeline_mode<synchronous>, transform_indices = @transform_7, window_bounds = array<i64: 16, 4>}, {pipeline_mode = #tpu.pipeline_mode<synchronous>, transform_indices = @transform_8, window_bounds = array<i64: 16, 4>}, {pipeline_mode = #tpu.pipeline_mode<synchronous>, transform_indices = @transform_9, window_bounds = array<i64: 1, 4>}, {pipeline_mode = #tpu.pipeline_mode<synchronous>, transform_indices = @transform_10, window_bounds = array<i64: 16, 4>}, {pipeline_mode = #tpu.pipeline_mode<synchronous>, transform_indices = @transform_11, window_bounds = array<i64: 16, 1>}, {pipeline_mode = #tpu.pipeline_mode<synchronous>, transform_indices = @transform_12, window_bounds = array<i64: 16, 1>}, {pipeline_mode = #tpu.pipeline_mode<synchronous>, transform_indices = @transform_13, window_bounds = array<i64: 16, 1>}, {transform_indices = @transform_14, window_bounds = array<i64: 1, 1>}, {transform_indices = @transform_15, window_bounds = array<i64: 1, 16, 256>}, {transform_indices = @transform_16, window_bounds = array<i64: 1, 16, 256>}, {transform_indices = @transform_17, window_bounds = array<i64: 1, 16, 256>}]} {
    %c0 = arith.constant 0 : index
    %c0_0 = arith.constant 0 : index
    %c0_1 = arith.constant 0 : index
    %0 = vector.load %arg1[%c0, %c0_0, %c0_1] : memref<1x16x256xf32, #tpu.memory_space<vmem>>, vector<1x16x256xf32>
    %1 = vector.shape_cast %0 : vector<1x16x256xf32> to vector<16x256xf32>
    %c0_2 = arith.constant 0 : index
    %c0_3 = arith.constant 0 : index
    %c0_4 = arith.constant 0 : index
    %2 = vector.load %arg2[%c0_2, %c0_3, %c0_4] : memref<1x16x256xf32, #tpu.memory_space<vmem>>, vector<1x16x256xf32>
    %3 = vector.shape_cast %2 : vector<1x16x256xf32> to vector<16x256xf32>
    %cst = arith.constant dense<0.000000e+00> : vector<16xf32>
    %4 = vector.multi_reduction <add>, %1, %cst [1] : vector<16x256xf32> to vector<16xf32>
    %5 = vector.shape_cast %4 : vector<16xf32> to vector<16x1xf32>
    %cst_5 = arith.constant 3.906250e-03 : f32
    %6 = vector.broadcast %cst_5 : f32 to vector<16x1xf32>
    %7 = arith.mulf %5, %6 : vector<16x1xf32>
    %cst_6 = arith.constant dense<0.000000e+00> : vector<16xf32>
    %8 = vector.multi_reduction <add>, %3, %cst_6 [1] : vector<16x256xf32> to vector<16xf32>
    %9 = vector.shape_cast %8 : vector<16xf32> to vector<16x1xf32>
    %cst_7 = arith.constant 3.906250e-03 : f32
    %10 = vector.broadcast %cst_7 : f32 to vector<16x1xf32>
    %11 = arith.mulf %9, %10 : vector<16x1xf32>
    %c0_8 = arith.constant 0 : index
    %c0_9 = arith.constant 0 : index
    %12 = vector.load %arg3[%c0_8, %c0_9] : memref<16x4xf32, #tpu.memory_space<vmem>>, vector<16x4xf32>
    %c0_10 = arith.constant 0 : index
    %c0_11 = arith.constant 0 : index
    %13 = vector.load %arg4[%c0_10, %c0_11] : memref<16x4xf32, #tpu.memory_space<vmem>>, vector<16x4xf32>
    %c0_12 = arith.constant 0 : index
    %c0_13 = arith.constant 0 : index
    %14 = vector.load %arg5[%c0_12, %c0_13] : memref<1x4xf32, #tpu.memory_space<vmem>>, vector<1x4xf32>
    %c0_14 = arith.constant 0 : index
    %c0_15 = arith.constant 0 : index
    %15 = vector.load %arg6[%c0_14, %c0_15] : memref<16x4xf32, #tpu.memory_space<vmem>>, vector<16x4xf32>
    %c0_16 = arith.constant 0 : index
    %c0_17 = arith.constant 0 : index
    %16 = vector.load %arg7[%c0_16, %c0_17] : memref<16x1xf32, #tpu.memory_space<vmem>>, vector<16x1xf32>
    %17 = vector.broadcast %11 : vector<16x1xf32> to vector<16x4xf32>
    %18 = arith.mulf %17, %12 : vector<16x4xf32>
    %cst_18 = arith.constant dense<0.000000e+00> : vector<4xf32>
    %19 = vector.multi_reduction <add>, %18, %cst_18 [0] : vector<16x4xf32> to vector<4xf32>
    %20 = vector.shape_cast %19 : vector<4xf32> to vector<1x4xf32>
    %21 = vector.broadcast %7 : vector<16x1xf32> to vector<16x4xf32>
    %22 = arith.mulf %21, %13 : vector<16x4xf32>
    %cst_19 = arith.constant dense<0.000000e+00> : vector<4xf32>
    %23 = vector.multi_reduction <add>, %22, %cst_19 [0] : vector<16x4xf32> to vector<4xf32>
    %24 = vector.shape_cast %23 : vector<4xf32> to vector<1x4xf32>
    %25 = arith.addf %20, %24 : vector<1x4xf32>
    %26 = arith.addf %25, %14 : vector<1x4xf32>
    %cst_20 = arith.constant 0.000000e+00 : f32
    %27 = vector.broadcast %cst_20 : f32 to vector<1x4xf32>
    %28 = arith.maximumf %26, %27 : vector<1x4xf32>
    %29 = vector.broadcast %28 : vector<1x4xf32> to vector<16x4xf32>
    %30 = arith.mulf %29, %15 : vector<16x4xf32>
    %cst_21 = arith.constant dense<0.000000e+00> : vector<16xf32>
    %31 = vector.multi_reduction <add>, %30, %cst_21 [1] : vector<16x4xf32> to vector<16xf32>
    %32 = vector.shape_cast %31 : vector<16xf32> to vector<16x1xf32>
    %33 = arith.addf %32, %16 : vector<16x1xf32>
    %34 = arith.negf %33 : vector<16x1xf32>
    %35 = math.exp %34 : vector<16x1xf32>
    %cst_22 = arith.constant 1.000000e+00 : f32
    %36 = vector.broadcast %cst_22 : f32 to vector<16x1xf32>
    %37 = arith.addf %36, %35 : vector<16x1xf32>
    %38 = arith.divf %36, %37 : vector<16x1xf32>
    %c0_23 = arith.constant 0 : index
    %c0_24 = arith.constant 0 : index
    %39 = vector.load %arg8[%c0_23, %c0_24] : memref<16x4xf32, #tpu.memory_space<vmem>>, vector<16x4xf32>
    %c0_25 = arith.constant 0 : index
    %c0_26 = arith.constant 0 : index
    %40 = vector.load %arg9[%c0_25, %c0_26] : memref<16x4xf32, #tpu.memory_space<vmem>>, vector<16x4xf32>
    %c0_27 = arith.constant 0 : index
    %c0_28 = arith.constant 0 : index
    %41 = vector.load %arg10[%c0_27, %c0_28] : memref<1x4xf32, #tpu.memory_space<vmem>>, vector<1x4xf32>
    %c0_29 = arith.constant 0 : index
    %c0_30 = arith.constant 0 : index
    %42 = vector.load %arg11[%c0_29, %c0_30] : memref<16x4xf32, #tpu.memory_space<vmem>>, vector<16x4xf32>
    %c0_31 = arith.constant 0 : index
    %c0_32 = arith.constant 0 : index
    %43 = vector.load %arg12[%c0_31, %c0_32] : memref<16x1xf32, #tpu.memory_space<vmem>>, vector<16x1xf32>
    %44 = vector.broadcast %7 : vector<16x1xf32> to vector<16x4xf32>
    %45 = arith.mulf %44, %39 : vector<16x4xf32>
    %cst_33 = arith.constant dense<0.000000e+00> : vector<4xf32>
    %46 = vector.multi_reduction <add>, %45, %cst_33 [0] : vector<16x4xf32> to vector<4xf32>
    %47 = vector.shape_cast %46 : vector<4xf32> to vector<1x4xf32>
    %48 = vector.broadcast %11 : vector<16x1xf32> to vector<16x4xf32>
    %49 = arith.mulf %48, %40 : vector<16x4xf32>
    %cst_34 = arith.constant dense<0.000000e+00> : vector<4xf32>
    %50 = vector.multi_reduction <add>, %49, %cst_34 [0] : vector<16x4xf32> to vector<4xf32>
    %51 = vector.shape_cast %50 : vector<4xf32> to vector<1x4xf32>
    %52 = arith.addf %47, %51 : vector<1x4xf32>
    %53 = arith.addf %52, %41 : vector<1x4xf32>
    %cst_35 = arith.constant 0.000000e+00 : f32
    %54 = vector.broadcast %cst_35 : f32 to vector<1x4xf32>
    %55 = arith.maximumf %53, %54 : vector<1x4xf32>
    %56 = vector.broadcast %55 : vector<1x4xf32> to vector<16x4xf32>
    %57 = arith.mulf %56, %42 : vector<16x4xf32>
    %cst_36 = arith.constant dense<0.000000e+00> : vector<16xf32>
    %58 = vector.multi_reduction <add>, %57, %cst_36 [1] : vector<16x4xf32> to vector<16xf32>
    %59 = vector.shape_cast %58 : vector<16xf32> to vector<16x1xf32>
    %60 = arith.addf %59, %43 : vector<16x1xf32>
    %61 = arith.negf %60 : vector<16x1xf32>
    %62 = math.exp %61 : vector<16x1xf32>
    %cst_37 = arith.constant 1.000000e+00 : f32
    %63 = vector.broadcast %cst_37 : f32 to vector<16x1xf32>
    %64 = arith.addf %63, %62 : vector<16x1xf32>
    %65 = arith.divf %63, %64 : vector<16x1xf32>
    %c0_38 = arith.constant 0 : index
    %c0_39 = arith.constant 0 : index
    %66 = vector.load %arg13[%c0_38, %c0_39] : memref<16x1xf32, #tpu.memory_space<vmem>>, vector<16x1xf32>
    %c0_40 = arith.constant 0 : index
    %c0_41 = arith.constant 0 : index
    %67 = vector.load %arg14[%c0_40, %c0_41] : memref<16x1xf32, #tpu.memory_space<vmem>>, vector<16x1xf32>
    %68 = arith.mulf %67, %65 : vector<16x1xf32>
    %69 = arith.addf %66, %68 : vector<16x1xf32>
    %70 = arith.mulf %66, %38 : vector<16x1xf32>
    %71 = arith.addf %67, %70 : vector<16x1xf32>
    %72 = vector.broadcast %69 : vector<16x1xf32> to vector<16x256xf32>
    %73 = arith.mulf %1, %72 : vector<16x256xf32>
    %74 = vector.broadcast %71 : vector<16x1xf32> to vector<16x256xf32>
    %75 = arith.mulf %3, %74 : vector<16x256xf32>
    %76 = arith.addf %73, %75 : vector<16x256xf32>
    %cst_42 = arith.constant dense<0.000000e+00> : vector<256xf32>
    %77 = vector.multi_reduction <add>, %76, %cst_42 [0] : vector<16x256xf32> to vector<256xf32>
    %78 = vector.shape_cast %77 : vector<256xf32> to vector<1x256xf32>
    %c0_43 = arith.constant 0 : index
    %c0_44 = arith.constant 0 : index
    %79 = memref.load %arg15[%c0_43, %c0_44] : memref<1x1xf32, #tpu.memory_space<smem>>
    %80 = vector.broadcast %79 : f32 to vector<1x256xf32>
    %81 = arith.addf %78, %80 : vector<1x256xf32>
    %82 = arith.negf %81 : vector<1x256xf32>
    %83 = math.exp %82 : vector<1x256xf32>
    %cst_45 = arith.constant 1.000000e+00 : f32
    %84 = vector.broadcast %cst_45 : f32 to vector<1x256xf32>
    %85 = arith.addf %84, %83 : vector<1x256xf32>
    %86 = arith.divf %84, %85 : vector<1x256xf32>
    %87 = vector.broadcast %86 : vector<1x256xf32> to vector<16x256xf32>
    %88 = arith.mulf %1, %87 : vector<16x256xf32>
    %cst_46 = arith.constant 1.000000e+00 : f32
    %89 = vector.broadcast %cst_46 : f32 to vector<1x256xf32>
    %90 = arith.subf %89, %86 : vector<1x256xf32>
    %91 = vector.broadcast %90 : vector<1x256xf32> to vector<16x256xf32>
    %92 = arith.mulf %3, %91 : vector<16x256xf32>
    %93 = arith.addf %88, %92 : vector<16x256xf32>
    %c0_47 = arith.constant 0 : index
    %c0_48 = arith.constant 0 : index
    %c0_49 = arith.constant 0 : index
    %94 = vector.load %arg18[%c0_47, %c0_48, %c0_49] : memref<1x16x256xf32, #tpu.memory_space<vmem>>, vector<1x16x256xf32>
    %95 = vector.shape_cast %94 : vector<1x16x256xf32> to vector<16x256xf32>
    %96 = vector.shape_cast %93 : vector<16x256xf32> to vector<1x16x256xf32>
    tpu.vector_store %arg18[%c0_47, %c0_48, %c0_49], %96 {strides = array<i32>} : memref<1x16x256xf32, #tpu.memory_space<vmem>>, vector<1x16x256xf32>,
    %97 = arith.addf %1, %93 : vector<16x256xf32>
    %cst_50 = arith.constant 5.000000e-01 : f32
    %98 = vector.broadcast %cst_50 : f32 to vector<16x256xf32>
    %99 = arith.mulf %97, %98 : vector<16x256xf32>
    %cst_51 = arith.constant 0.000000e+00 : f32
    %100 = vector.broadcast %cst_51 : f32 to vector<16x256xf32>
    %101 = arith.maximumf %99, %100 : vector<16x256xf32>
    %c0_52 = arith.constant 0 : index
    %c0_53 = arith.constant 0 : index
    %c0_54 = arith.constant 0 : index
    %102 = vector.load %arg16[%c0_52, %c0_53, %c0_54] : memref<1x16x256xf32, #tpu.memory_space<vmem>>, vector<1x16x256xf32>
    %103 = vector.shape_cast %102 : vector<1x16x256xf32> to vector<16x256xf32>
    %104 = vector.shape_cast %101 : vector<16x256xf32> to vector<1x16x256xf32>
    tpu.vector_store %arg16[%c0_52, %c0_53, %c0_54], %104 {strides = array<i32>} : memref<1x16x256xf32, #tpu.memory_space<vmem>>, vector<1x16x256xf32>,
    %105 = arith.addf %3, %93 : vector<16x256xf32>
    %cst_55 = arith.constant 5.000000e-01 : f32
    %106 = vector.broadcast %cst_55 : f32 to vector<16x256xf32>
    %107 = arith.mulf %105, %106 : vector<16x256xf32>
    %cst_56 = arith.constant 0.000000e+00 : f32
    %108 = vector.broadcast %cst_56 : f32 to vector<16x256xf32>
    %109 = arith.maximumf %107, %108 : vector<16x256xf32>
    %c0_57 = arith.constant 0 : index
    %c0_58 = arith.constant 0 : index
    %c0_59 = arith.constant 0 : index
    %110 = vector.load %arg17[%c0_57, %c0_58, %c0_59] : memref<1x16x256xf32, #tpu.memory_space<vmem>>, vector<1x16x256xf32>
    %111 = vector.shape_cast %110 : vector<1x16x256xf32> to vector<16x256xf32>
    %112 = vector.shape_cast %109 : vector<16x256xf32> to vector<1x16x256xf32>
    tpu.vector_store %arg17[%c0_57, %c0_58, %c0_59], %112 {strides = array<i32>} : memref<1x16x256xf32, #tpu.memory_space<vmem>>, vector<1x16x256xf32>,
    return
  }
  func.func @transform_0(%arg0: i32) -> (i32, i32, i32) {
    %c0_i32 = arith.constant 0 : i32
    %c0_i32_0 = arith.constant 0 : i32
    %c0_i32_1 = arith.constant 0 : i32
    return %arg0, %c0_i32, %c0_i32_0 : i32, i32, i32
  }
  func.func @transform_1(%arg0: i32) -> (i32, i32, i32) {
    %c0_i32 = arith.constant 0 : i32
    %c0_i32_0 = arith.constant 0 : i32
    %c0_i32_1 = arith.constant 0 : i32
    return %arg0, %c0_i32, %c0_i32_0 : i32, i32, i32
  }
  func.func @transform_2(%arg0: i32) -> (i32, i32) {
    %c0_i32 = arith.constant 0 : i32
    %c0_i32_0 = arith.constant 0 : i32
    %c0_i32_1 = arith.constant 0 : i32
    return %c0_i32, %c0_i32_0 : i32, i32
  }
  func.func @transform_3(%arg0: i32) -> (i32, i32) {
    %c0_i32 = arith.constant 0 : i32
    %c0_i32_0 = arith.constant 0 : i32
    %c0_i32_1 = arith.constant 0 : i32
    return %c0_i32, %c0_i32_0 : i32, i32
  }
  func.func @transform_4(%arg0: i32) -> (i32, i32) {
    %c0_i32 = arith.constant 0 : i32
    %c0_i32_0 = arith.constant 0 : i32
    %c0_i32_1 = arith.constant 0 : i32
    return %c0_i32, %c0_i32_0 : i32, i32
  }
  func.func @transform_5(%arg0: i32) -> (i32, i32) {
    %c0_i32 = arith.constant 0 : i32
    %c0_i32_0 = arith.constant 0 : i32
    %c0_i32_1 = arith.constant 0 : i32
    return %c0_i32, %c0_i32_0 : i32, i32
  }
  func.func @transform_6(%arg0: i32) -> (i32, i32) {
    %c0_i32 = arith.constant 0 : i32
    %c0_i32_0 = arith.constant 0 : i32
    %c0_i32_1 = arith.constant 0 : i32
    return %c0_i32, %c0_i32_0 : i32, i32
  }
  func.func @transform_7(%arg0: i32) -> (i32, i32) {
    %c0_i32 = arith.constant 0 : i32
    %c0_i32_0 = arith.constant 0 : i32
    %c0_i32_1 = arith.constant 0 : i32
    return %c0_i32, %c0_i32_0 : i32, i32
  }
  func.func @transform_8(%arg0: i32) -> (i32, i32) {
    %c0_i32 = arith.constant 0 : i32
    %c0_i32_0 = arith.constant 0 : i32
    %c0_i32_1 = arith.constant 0 : i32
    return %c0_i32, %c0_i32_0 : i32, i32
  }
  func.func @transform_9(%arg0: i32) -> (i32, i32) {
    %c0_i32 = arith.constant 0 : i32
    %c0_i32_0 = arith.constant 0 : i32
    %c0_i32_1 = arith.constant 0 : i32
    return %c0_i32, %c0_i32_0 : i32, i32
  }
  func.func @transform_10(%arg0: i32) -> (i32, i32) {
    %c0_i32 = arith.constant 0 : i32
    %c0_i32_0 = arith.constant 0 : i32
    %c0_i32_1 = arith.constant 0 : i32
    return %c0_i32, %c0_i32_0 : i32, i32
  }
  func.func @transform_11(%arg0: i32) -> (i32, i32) {
    %c0_i32 = arith.constant 0 : i32
    %c0_i32_0 = arith.constant 0 : i32
    %c0_i32_1 = arith.constant 0 : i32
    return %c0_i32, %c0_i32_0 : i32, i32
  }
  func.func @transform_12(%arg0: i32) -> (i32, i32) {
    %c0_i32 = arith.constant 0 : i32
    %c0_i32_0 = arith.constant 0 : i32
    %c0_i32_1 = arith.constant 0 : i32
    return %c0_i32, %c0_i32_0 : i32, i32
  }
  func.func @transform_13(%arg0: i32) -> (i32, i32) {
    %c0_i32 = arith.constant 0 : i32
    %c0_i32_0 = arith.constant 0 : i32
    %c0_i32_1 = arith.constant 0 : i32
    return %c0_i32, %c0_i32_0 : i32, i32
  }
  func.func @transform_14(%arg0: i32) -> (i32, i32) {
    %c0_i32 = arith.constant 0 : i32
    %c0_i32_0 = arith.constant 0 : i32
    %c0_i32_1 = arith.constant 0 : i32
    return %c0_i32, %c0_i32_0 : i32, i32
  }
  func.func @transform_15(%arg0: i32) -> (i32, i32, i32) {
    %c0_i32 = arith.constant 0 : i32
    %c0_i32_0 = arith.constant 0 : i32
    %c0_i32_1 = arith.constant 0 : i32
    return %arg0, %c0_i32, %c0_i32_0 : i32, i32, i32
  }
  func.func @transform_16(%arg0: i32) -> (i32, i32, i32) {
    %c0_i32 = arith.constant 0 : i32
    %c0_i32_0 = arith.constant 0 : i32
    %c0_i32_1 = arith.constant 0 : i32
    return %arg0, %c0_i32, %c0_i32_0 : i32, i32, i32
  }
  func.func @transform_17(%arg0: i32) -> (i32, i32, i32) {
    %c0_i32 = arith.constant 0 : i32
    %c0_i32_0 = arith.constant 0 : i32
    %c0_i32_1 = arith.constant 0 : i32
    return %arg0, %c0_i32, %c0_i32_0 : i32, i32, i32
  }
}

</mosaic_0001>

<llo_original>
// kernel: tpu_custom_call.1
$region0: #{tpu_custom_call.1}
  #allocation0 [shape = 'u32[]', space=smem, size = 0x4, offset = 0x4, fixed_abs, tag = 'smem constant byte address 0x4 - core index']
  #allocation1 [shape = 'u32[144,128]{1,0:T(1,128)}', space=vmem, size = 0x12000, scoped, tag = 'internal scratch']
  #allocation2 [shape = 'f32[1,1]{1,0:T(1,128)S(6)}', space=smem, size = 0x200, scoped, tag = 'scoped memory for tpu_custom_call.1']
  %s0 = inlined_call_operand.vmem [shape: f32[2,16,256], index: 0, kind: input, shape index: {}]
  %s1 = inlined_call_operand.vmem [shape: f32[2,16,256], index: 1, kind: input, shape index: {}]
  %s2 = inlined_call_operand.vmem [shape: f32[16,4], index: 2, kind: input, shape index: {}]
  %s3 = inlined_call_operand.vmem [shape: f32[16,4], index: 3, kind: input, shape index: {}]
  %s4 = inlined_call_operand.vmem [shape: f32[1,4], index: 4, kind: input, shape index: {}]
  %s5 = inlined_call_operand.vmem [shape: f32[16,4], index: 5, kind: input, shape index: {}]
  %s6 = inlined_call_operand.vmem [shape: f32[16,1], index: 6, kind: input, shape index: {}]
  %s7 = inlined_call_operand.vmem [shape: f32[16,4], index: 7, kind: input, shape index: {}]
  %s8 = inlined_call_operand.vmem [shape: f32[16,4], index: 8, kind: input, shape index: {}]
  %s9 = inlined_call_operand.vmem [shape: f32[1,4], index: 9, kind: input, shape index: {}]
  %s10 = inlined_call_operand.vmem [shape: f32[16,4], index: 10, kind: input, shape index: {}]
  %s11 = inlined_call_operand.vmem [shape: f32[16,1], index: 11, kind: input, shape index: {}]
  %s12 = inlined_call_operand.vmem [shape: f32[16,1], index: 12, kind: input, shape index: {}]
  %s13 = inlined_call_operand.vmem [shape: f32[16,1], index: 13, kind: input, shape index: {}]
  %s14 = inlined_call_operand.<no memory space> [shape: f32[1,1], index: 14, kind: input, shape index: {}]
  %s15 = inlined_call_operand.hbm [shape: f32[2,16,256], index: 15, kind: output, shape index: {0}]
  %s16 = inlined_call_operand.hbm [shape: f32[2,16,256], index: 16, kind: output, shape index: {1}]
  %s17 = inlined_call_operand.hbm [shape: f32[2,16,256], index: 17, kind: output, shape index: {2}]
  %18 = xla_tuple %s15, %s16, %s17
  %s19 = sld [smem:[#allocation0]]
  $region109: #{tpu_custom_call.1} parent=0
    _
  %s21 = ssub.s32 1, %s19
  %s22 = scalar_select 0, %s21, %s19
  %23 = sst [smem:[#allocation2]] %s14
  $region1: #{tpu_custom_call.1} parent=0
    #allocation3 [shape = 'u8[32768]{0}', space=vmem, size = 0x8000, scoped, tag = 'output window, operand 0']
    #allocation4 [shape = 's32[2]{0}', space=sflag, size = 0x8, scoped, tag = 'scoped memory for tpu_custom_call.1']
    #allocation5 [shape = 'u8[32768]{0}', space=vmem, size = 0x8000, scoped, tag = 'output window, operand 1']
    #allocation6 [shape = 's32[2]{0}', space=sflag, size = 0x8, scoped, tag = 'scoped memory for tpu_custom_call.1']
    #allocation7 [shape = 'u8[32768]{0}', space=vmem, size = 0x8000, scoped, tag = 'output window, operand 2']
    %24 = vsyncpa [#allocation4], 0
    %s25 = scalar_lea.sflag [#allocation4], 1
    %26 = vsyncpa %s25, 0
    %27 = vsyncpa [#allocation6], 0
    %s28 = scalar_lea.sflag [#allocation6], 1
    %29 = vsyncpa %s28, 0
    loop: start=0, step=1, limit=4
    $region2: #{tpu_custom_call.1} parent=1 // loop_pre_header
      _
    $region3: #{tpu_custom_call.1} parent=1 // loop_header
      %s31 = sphi 0, %s35
      %p32 = scmp.ge.s32.totalorder %s31, 4
      %s41 = sphi 0, %s43
      %s44 = sphi 0, %s41
      %s45 = sphi 0, %s44
      %s61 = sphi 0, %s45
      %s67 = sphi 0, %s69
      %s70 = sphi 0, %s67
      %s71 = sphi 0, %s70
      %s87 = sphi 0, %s71
      %s91 = sphi 0, %s91
      %s93 = sphi 0, %s91
      %s94 = sphi 0, %s93
      %s108 = sphi 0, %s94
      %s112 = sphi 0, %s112
      %s114 = sphi 0, %s112
      %s115 = sphi 0, %s114
      %s129 = sphi 0, %s115
      %s133 = sphi 0, %s133
      %s135 = sphi 0, %s133
      %s136 = sphi 0, %s135
      %s150 = sphi 0, %s136
      %s154 = sphi 0, %s154
      %s156 = sphi 0, %s154
      %s157 = sphi 0, %s156
      %s171 = sphi 0, %s157
      %s175 = sphi 0, %s175
      %s177 = sphi 0, %s175
      %s178 = sphi 0, %s177
      %s192 = sphi 0, %s178
      %s196 = sphi 0, %s196
      %s198 = sphi 0, %s196
      %s199 = sphi 0, %s198
      %s213 = sphi 0, %s199
      %s217 = sphi 0, %s217
      %s219 = sphi 0, %s217
      %s220 = sphi 0, %s219
      %s234 = sphi 0, %s220
      %s238 = sphi 0, %s238
      %s240 = sphi 0, %s238
      %s241 = sphi 0, %s240
      %s255 = sphi 0, %s241
      %s259 = sphi 0, %s259
      %s261 = sphi 0, %s259
      %s262 = sphi 0, %s261
      %s276 = sphi 0, %s262
      %s280 = sphi 0, %s280
      %s282 = sphi 0, %s280
      %s283 = sphi 0, %s282
      %s297 = sphi 0, %s283
      %s301 = sphi 0, %s301
      %s303 = sphi 0, %s301
      %s304 = sphi 0, %s303
      %s318 = sphi 0, %s304
      %s322 = sphi 0, %s322
      %s324 = sphi 0, %s322
      %s325 = sphi 0, %s324
      %s339 = sphi 0, %s325
      %s343 = sphi 0, %s343
      %s345 = sphi 0, %s343
      %s346 = sphi 0, %s345
      %s360 = sphi 0, %s346
      %s366 = sphi 0, %s368
      %s369 = sphi 0, %s366
      %s370 = sphi 0, %s369
      %s386 = sphi 0, %s370
      %s392 = sphi 0, %s394
      %s395 = sphi 0, %s392
      %s396 = sphi 0, %s395
      %s412 = sphi 0, %s396
      %s418 = sphi 0, %s420
      %s421 = sphi 0, %s418
      %s422 = sphi 0, %s421
      %s438 = sphi 0, %s422
    $region4: #{tpu_custom_call.1} parent=1 // loop_header_branch
      %34 = sbr.rel (%p32) target = $region8
    $region5: #{tpu_custom_call.1} parent=1 // loop_body
      %s36 = ssub.s32 %s31, 1
      %s37 = ssub.s32 %s31, 2
      %s38 = sadd.s32 %s31, 1
      %s39 = ssub.s32 %s31, %s38
      %p40 = scmp.eq.s32.totalorder %s39, 0
      %s42 = sadd.s32 %s41, 1
      %s43 = scalar_select %p40, %s41, %s42
      %p46 = pneg %p40
      %p47 = scmp.eq.s32.totalorder %s31, 1
      %p48 = por %p46, %p47
      %p49 = scmp.ne.s32.totalorder %s41, %s44
      %p50 = scmp.eq.s32.totalorder %s31, 0
      %p51 = por %p49, %p50
      %p52 = scmp.ne.s32.totalorder %s41, %s44
      %p53 = scmp.eq.s32.totalorder %s36, 1
      %p54 = por %p52, %p53
      %p55 = scmp.ne.s32.totalorder %s44, %s45
      %p56 = scmp.eq.s32.totalorder %s36, 0
      %p57 = por %p55, %p56
      %p58 = scmp.ne.s32.totalorder %s44, %s45
      %p59 = scmp.eq.s32.totalorder %s37, 1
      %p60 = por %p58, %p59
      %p62 = scmp.ne.s32.totalorder %s45, %s61
      %p63 = scmp.eq.s32.totalorder %s37, 0
      %p64 = por %p62, %p63
      %s65 = ssub.s32 %s31, %s38
      %p66 = scmp.eq.s32.totalorder %s65, 0
      %s68 = sadd.s32 %s67, 1
      %s69 = scalar_select %p66, %s67, %s68
      %p72 = pneg %p66
      %p73 = scmp.eq.s32.totalorder %s31, 1
      %p74 = por %p72, %p73
      %p75 = scmp.ne.s32.totalorder %s67, %s70
      %p76 = scmp.eq.s32.totalorder %s31, 0
      %p77 = por %p75, %p76
      %p78 = scmp.ne.s32.totalorder %s67, %s70
      %p79 = scmp.eq.s32.totalorder %s36, 1
      %p80 = por %p78, %p79
      %p81 = scmp.ne.s32.totalorder %s70, %s71
      %p82 = scmp.eq.s32.totalorder %s36, 0
      %p83 = por %p81, %p82
      %p84 = scmp.ne.s32.totalorder %s70, %s71
      %p85 = scmp.eq.s32.totalorder %s37, 1
      %p86 = por %p84, %p85
      %p88 = scmp.ne.s32.totalorder %s71, %s87
      %p89 = scmp.eq.s32.totalorder %s37, 0
      %p90 = por %p88, %p89
      %s92 = sadd.s32 %s91, 1
      %p95 = scmp.eq.s32.totalorder %s31, 1
      %p96 = scmp.ne.s32.totalorder %s91, %s93
      %p97 = scmp.eq.s32.totalorder %s31, 0
      %p98 = por %p96, %p97
      %p99 = scmp.ne.s32.totalorder %s91, %s93
      %p100 = scmp.eq.s32.totalorder %s36, 1
      %p101 = por %p99, %p100
      %p102 = scmp.ne.s32.totalorder %s93, %s94
      %p103 = scmp.eq.s32.totalorder %s36, 0
      %p104 = por %p102, %p103
      %p105 = scmp.ne.s32.totalorder %s93, %s94
      %p106 = scmp.eq.s32.totalorder %s37, 1
      %p107 = por %p105, %p106
      %p109 = scmp.ne.s32.totalorder %s94, %s108
      %p110 = scmp.eq.s32.totalorder %s37, 0
      %p111 = por %p109, %p110
      %s113 = sadd.s32 %s112, 1
      %p116 = scmp.eq.s32.totalorder %s31, 1
      %p117 = scmp.ne.s32.totalorder %s112, %s114
      %p118 = scmp.eq.s32.totalorder %s31, 0
      %p119 = por %p117, %p118
      %p120 = scmp.ne.s32.totalorder %s112, %s114
      %p121 = scmp.eq.s32.totalorder %s36, 1
      %p122 = por %p120, %p121
      %p123 = scmp.ne.s32.totalorder %s114, %s115
      %p124 = scmp.eq.s32.totalorder %s36, 0
      %p125 = por %p123, %p124
      %p126 = scmp.ne.s32.totalorder %s114, %s115
      %p127 = scmp.eq.s32.totalorder %s37, 1
      %p128 = por %p126, %p127
      %p130 = scmp.ne.s32.totalorder %s115, %s129
      %p131 = scmp.eq.s32.totalorder %s37, 0
      %p132 = por %p130, %p131
      %s134 = sadd.s32 %s133, 1
      %p137 = scmp.eq.s32.totalorder %s31, 1
      %p138 = scmp.ne.s32.totalorder %s133, %s135
      %p139 = scmp.eq.s32.totalorder %s31, 0
      %p140 = por %p138, %p139
      %p141 = scmp.ne.s32.totalorder %s133, %s135
      %p142 = scmp.eq.s32.totalorder %s36, 1
      %p143 = por %p141, %p142
      %p144 = scmp.ne.s32.totalorder %s135, %s136
      %p145 = scmp.eq.s32.totalorder %s36, 0
      %p146 = por %p144, %p145
      %p147 = scmp.ne.s32.totalorder %s135, %s136
      %p148 = scmp.eq.s32.totalorder %s37, 1
      %p149 = por %p147, %p148
      %p151 = scmp.ne.s32.totalorder %s136, %s150
      %p152 = scmp.eq.s32.totalorder %s37, 0
      %p153 = por %p151, %p152
      %s155 = sadd.s32 %s154, 1
      %p158 = scmp.eq.s32.totalorder %s31, 1
      %p159 = scmp.ne.s32.totalorder %s154, %s156
      %p160 = scmp.eq.s32.totalorder %s31, 0
      %p161 = por %p159, %p160
      %p162 = scmp.ne.s32.totalorder %s154, %s156
      %p163 = scmp.eq.s32.totalorder %s36, 1
      %p164 = por %p162, %p163
      %p165 = scmp.ne.s32.totalorder %s156, %s157
      %p166 = scmp.eq.s32.totalorder %s36, 0
      %p167 = por %p165, %p166
      %p168 = scmp.ne.s32.totalorder %s156, %s157
      %p169 = scmp.eq.s32.totalorder %s37, 1
      %p170 = por %p168, %p169
      %p172 = scmp.ne.s32.totalorder %s157, %s171
      %p173 = scmp.eq.s32.totalorder %s37, 0
      %p174 = por %p172, %p173
      %s176 = sadd.s32 %s175, 1
      %p179 = scmp.eq.s32.totalorder %s31, 1
      %p180 = scmp.ne.s32.totalorder %s175, %s177
      %p181 = scmp.eq.s32.totalorder %s31, 0
      %p182 = por %p180, %p181
      %p183 = scmp.ne.s32.totalorder %s175, %s177
      %p184 = scmp.eq.s32.totalorder %s36, 1
      %p185 = por %p183, %p184
      %p186 = scmp.ne.s32.totalorder %s177, %s178
      %p187 = scmp.eq.s32.totalorder %s36, 0
      %p188 = por %p186, %p187
      %p189 = scmp.ne.s32.totalorder %s177, %s178
      %p190 = scmp.eq.s32.totalorder %s37, 1
      %p191 = por %p189, %p190
      %p193 = scmp.ne.s32.totalorder %s178, %s192
      %p194 = scmp.eq.s32.totalorder %s37, 0
      %p195 = por %p193, %p194
      %s197 = sadd.s32 %s196, 1
      %p200 = scmp.eq.s32.totalorder %s31, 1
      %p201 = scmp.ne.s32.totalorder %s196, %s198
      %p202 = scmp.eq.s32.totalorder %s31, 0
      %p203 = por %p201, %p202
      %p204 = scmp.ne.s32.totalorder %s196, %s198
      %p205 = scmp.eq.s32.totalorder %s36, 1
      %p206 = por %p204, %p205
      %p207 = scmp.ne.s32.totalorder %s198, %s199
      %p208 = scmp.eq.s32.totalorder %s36, 0
      %p209 = por %p207, %p208
      %p210 = scmp.ne.s32.totalorder %s198, %s199
      %p211 = scmp.eq.s32.totalorder %s37, 1
      %p212 = por %p210, %p211
      %p214 = scmp.ne.s32.totalorder %s199, %s213
      %p215 = scmp.eq.s32.totalorder %s37, 0
      %p216 = por %p214, %p215
      %s218 = sadd.s32 %s217, 1
      %p221 = scmp.eq.s32.totalorder %s31, 1
      %p222 = scmp.ne.s32.totalorder %s217, %s219
      %p223 = scmp.eq.s32.totalorder %s31, 0
      %p224 = por %p222, %p223
      %p225 = scmp.ne.s32.totalorder %s217, %s219
      %p226 = scmp.eq.s32.totalorder %s36, 1
      %p227 = por %p225, %p226
      %p228 = scmp.ne.s32.totalorder %s219, %s220
      %p229 = scmp.eq.s32.totalorder %s36, 0
      %p230 = por %p228, %p229
      %p231 = scmp.ne.s32.totalorder %s219, %s220
      %p232 = scmp.eq.s32.totalorder %s37, 1
      %p233 = por %p231, %p232
      %p235 = scmp.ne.s32.totalorder %s220, %s234
      %p236 = scmp.eq.s32.totalorder %s37, 0
      %p237 = por %p235, %p236
      %s239 = sadd.s32 %s238, 1
      %p242 = scmp.eq.s32.totalorder %s31, 1
      %p243 = scmp.ne.s32.totalorder %s238, %s240
      %p244 = scmp.eq.s32.totalorder %s31, 0
      %p245 = por %p243, %p244
      %p246 = scmp.ne.s32.totalorder %s238, %s240
      %p247 = scmp.eq.s32.totalorder %s36, 1
      %p248 = por %p246, %p247
      %p249 = scmp.ne.s32.totalorder %s240, %s241
      %p250 = scmp.eq.s32.totalorder %s36, 0
      %p251 = por %p249, %p250
      %p252 = scmp.ne.s32.totalorder %s240, %s241
      %p253 = scmp.eq.s32.totalorder %s37, 1
      %p254 = por %p252, %p253
      %p256 = scmp.ne.s32.totalorder %s241, %s255
      %p257 = scmp.eq.s32.totalorder %s37, 0
      %p258 = por %p256, %p257
      %s260 = sadd.s32 %s259, 1
      %p263 = scmp.eq.s32.totalorder %s31, 1
      %p264 = scmp.ne.s32.totalorder %s259, %s261
      %p265 = scmp.eq.s32.totalorder %s31, 0
      %p266 = por %p264, %p265
      %p267 = scmp.ne.s32.totalorder %s259, %s261
      %p268 = scmp.eq.s32.totalorder %s36, 1
      %p269 = por %p267, %p268
      %p270 = scmp.ne.s32.totalorder %s261, %s262
      %p271 = scmp.eq.s32.totalorder %s36, 0
      %p272 = por %p270, %p271
      %p273 = scmp.ne.s32.totalorder %s261, %s262
      %p274 = scmp.eq.s32.totalorder %s37, 1
      %p275 = por %p273, %p274
      %p277 = scmp.ne.s32.totalorder %s262, %s276
      %p278 = scmp.eq.s32.totalorder %s37, 0
      %p279 = por %p277, %p278
      %s281 = sadd.s32 %s280, 1
      %p284 = scmp.eq.s32.totalorder %s31, 1
      %p285 = scmp.ne.s32.totalorder %s280, %s282
      %p286 = scmp.eq.s32.totalorder %s31, 0
      %p287 = por %p285, %p286
      %p288 = scmp.ne.s32.totalorder %s280, %s282
      %p289 = scmp.eq.s32.totalorder %s36, 1
      %p290 = por %p288, %p289
      %p291 = scmp.ne.s32.totalorder %s282, %s283
      %p292 = scmp.eq.s32.totalorder %s36, 0
      %p293 = por %p291, %p292
      %p294 = scmp.ne.s32.totalorder %s282, %s283
      %p295 = scmp.eq.s32.totalorder %s37, 1
      %p296 = por %p294, %p295
      %p298 = scmp.ne.s32.totalorder %s283, %s297
      %p299 = scmp.eq.s32.totalorder %s37, 0
      %p300 = por %p298, %p299
      %s302 = sadd.s32 %s301, 1
      %p305 = scmp.eq.s32.totalorder %s31, 1
      %p306 = scmp.ne.s32.totalorder %s301, %s303
      %p307 = scmp.eq.s32.totalorder %s31, 0
      %p308 = por %p306, %p307
      %p309 = scmp.ne.s32.totalorder %s301, %s303
      %p310 = scmp.eq.s32.totalorder %s36, 1
      %p311 = por %p309, %p310
      %p312 = scmp.ne.s32.totalorder %s303, %s304
      %p313 = scmp.eq.s32.totalorder %s36, 0
      %p314 = por %p312, %p313
      %p315 = scmp.ne.s32.totalorder %s303, %s304
      %p316 = scmp.eq.s32.totalorder %s37, 1
      %p317 = por %p315, %p316
      %p319 = scmp.ne.s32.totalorder %s304, %s318
      %p320 = scmp.eq.s32.totalorder %s37, 0
      %p321 = por %p319, %p320
      %s323 = sadd.s32 %s322, 1
      %p326 = scmp.eq.s32.totalorder %s31, 1
      %p327 = scmp.ne.s32.totalorder %s322, %s324
      %p328 = scmp.eq.s32.totalorder %s31, 0
      %p329 = por %p327, %p328
      %p330 = scmp.ne.s32.totalorder %s322, %s324
      %p331 = scmp.eq.s32.totalorder %s36, 1
      %p332 = por %p330, %p331
      %p333 = scmp.ne.s32.totalorder %s324, %s325
      %p334 = scmp.eq.s32.totalorder %s36, 0
      %p335 = por %p333, %p334
      %p336 = scmp.ne.s32.totalorder %s324, %s325
      %p337 = scmp.eq.s32.totalorder %s37, 1
      %p338 = por %p336, %p337
      %p340 = scmp.ne.s32.totalorder %s325, %s339
      %p341 = scmp.eq.s32.totalorder %s37, 0
      %p342 = por %p340, %p341
      %s344 = sadd.s32 %s343, 1
      %p347 = scmp.eq.s32.totalorder %s31, 1
      %p348 = scmp.ne.s32.totalorder %s343, %s345
      %p349 = scmp.eq.s32.totalorder %s31, 0
      %p350 = por %p348, %p349
      %p351 = scmp.ne.s32.totalorder %s343, %s345
      %p352 = scmp.eq.s32.totalorder %s36, 1
      %p353 = por %p351, %p352
      %p354 = scmp.ne.s32.totalorder %s345, %s346
      %p355 = scmp.eq.s32.totalorder %s36, 0
      %p356 = por %p354, %p355
      %p357 = scmp.ne.s32.totalorder %s345, %s346
      %p358 = scmp.eq.s32.totalorder %s37, 1
      %p359 = por %p357, %p358
      %p361 = scmp.ne.s32.totalorder %s346, %s360
      %p362 = scmp.eq.s32.totalorder %s37, 0
      %p363 = por %p361, %p362
      %s364 = ssub.s32 %s31, %s38
      %p365 = scmp.eq.s32.totalorder %s364, 0
      %s367 = sadd.s32 %s366, 1
      %s368 = scalar_select %p365, %s366, %s367
      %p371 = pneg %p365
      %p372 = scmp.eq.s32.totalorder %s31, 1
      %p373 = por %p371, %p372
      %p374 = scmp.ne.s32.totalorder %s366, %s369
      %p375 = scmp.eq.s32.totalorder %s31, 0
      %p376 = por %p374, %p375
      %p377 = scmp.ne.s32.totalorder %s366, %s369
      %p378 = scmp.eq.s32.totalorder %s36, 1
      %p379 = por %p377, %p378
      %p380 = scmp.ne.s32.totalorder %s369, %s370
      %p381 = scmp.eq.s32.totalorder %s36, 0
      %p382 = por %p380, %p381
      %p383 = scmp.ne.s32.totalorder %s369, %s370
      %p384 = scmp.eq.s32.totalorder %s37, 1
      %p385 = por %p383, %p384
      %p387 = scmp.ne.s32.totalorder %s370, %s386
      %p388 = scmp.eq.s32.totalorder %s37, 0
      %p389 = por %p387, %p388
      %s390 = ssub.s32 %s31, %s38
      %p391 = scmp.eq.s32.totalorder %s390, 0
      %s393 = sadd.s32 %s392, 1
      %s394 = scalar_select %p391, %s392, %s393
      %p397 = pneg %p391
      %p398 = scmp.eq.s32.totalorder %s31, 1
      %p399 = por %p397, %p398
      %p400 = scmp.ne.s32.totalorder %s392, %s395
      %p401 = scmp.eq.s32.totalorder %s31, 0
      %p402 = por %p400, %p401
      %p403 = scmp.ne.s32.totalorder %s392, %s395
      %p404 = scmp.eq.s32.totalorder %s36, 1
      %p405 = por %p403, %p404
      %p406 = scmp.ne.s32.totalorder %s395, %s396
      %p407 = scmp.eq.s32.totalorder %s36, 0
      %p408 = por %p406, %p407
      %p409 = scmp.ne.s32.totalorder %s395, %s396
      %p410 = scmp.eq.s32.totalorder %s37, 1
      %p411 = por %p409, %p410
      %p413 = scmp.ne.s32.totalorder %s396, %s412
      %p414 = scmp.eq.s32.totalorder %s37, 0
      %p415 = por %p413, %p414
      %s416 = ssub.s32 %s31, %s38
      %p417 = scmp.eq.s32.totalorder %s416, 0
      %s419 = sadd.s32 %s418, 1
      %s420 = scalar_select %p417, %s418, %s419
      %p423 = pneg %p417
      %p424 = scmp.eq.s32.totalorder %s31, 1
      %p425 = por %p423, %p424
      %p426 = scmp.ne.s32.totalorder %s418, %s421
      %p427 = scmp.eq.s32.totalorder %s31, 0
      %p428 = por %p426, %p427
      %p429 = scmp.ne.s32.totalorder %s418, %s421
      %p430 = scmp.eq.s32.totalorder %s36, 1
      %p431 = por %p429, %p430
      %p432 = scmp.ne.s32.totalorder %s421, %s422
      %p433 = scmp.eq.s32.totalorder %s36, 0
      %p434 = por %p432, %p433
      %p435 = scmp.ne.s32.totalorder %s421, %s422
      %p436 = scmp.eq.s32.totalorder %s37, 1
      %p437 = por %p435, %p436
      %p439 = scmp.ne.s32.totalorder %s422, %s438
      %p440 = scmp.eq.s32.totalorder %s37, 0
      %p441 = por %p439, %p440
      %p442 = scmp.le.s32.totalorder 1, %s31
      %p443 = scmp.lt.s32.totalorder %s31, 3
      %p444 = pnand %p442, %p443
      %p445 = pneg %p444
      // Predicated region
      $region9: #{tpu_custom_call.1} parent=5 // pred_check
        _
      $region10: #{tpu_custom_call.1} parent=5 // pred_check_branch
        %447 = sbr.rel (%p444) target = $region12
      $region11: #{tpu_custom_call.1} parent=5 // pred_region
        %s448 = ssub.s32 %s31, 1
        // Predicated region
        $region13: #{tpu_custom_call.1} parent=11 // pred_check
          %p449 = pneg %p104
        $region14: #{tpu_custom_call.1} parent=11 // pred_check_branch
          %451 = sbr.rel (%p449) target = $region16
        $region15: #{tpu_custom_call.1} parent=11 // pred_region
          _
        $region16: #{tpu_custom_call.1} parent=11 // pred_fallthru
          _
        // Predicated region
        $region17: #{tpu_custom_call.1} parent=11 // pred_check
          %p452 = pneg %p125
        $region18: #{tpu_custom_call.1} parent=11 // pred_check_branch
          %454 = sbr.rel (%p452) target = $region20
        $region19: #{tpu_custom_call.1} parent=11 // pred_region
          _
        $region20: #{tpu_custom_call.1} parent=11 // pred_fallthru
          _
        // Predicated region
        $region21: #{tpu_custom_call.1} parent=11 // pred_check
          %p455 = pneg %p146
        $region22: #{tpu_custom_call.1} parent=11 // pred_check_branch
          %457 = sbr.rel (%p455) target = $region24
        $region23: #{tpu_custom_call.1} parent=11 // pred_region
          _
        $region24: #{tpu_custom_call.1} parent=11 // pred_fallthru
          _
        // Predicated region
        $region25: #{tpu_custom_call.1} parent=11 // pred_check
          %p458 = pneg %p167
        $region26: #{tpu_custom_call.1} parent=11 // pred_check_branch
          %460 = sbr.rel (%p458) target = $region28
        $region27: #{tpu_custom_call.1} parent=11 // pred_region
          _
        $region28: #{tpu_custom_call.1} parent=11 // pred_fallthru
          _
        // Predicated region
        $region29: #{tpu_custom_call.1} parent=11 // pred_check
          %p461 = pneg %p188
        $region30: #{tpu_custom_call.1} parent=11 // pred_check_branch
          %463 = sbr.rel (%p461) target = $region32
        $region31: #{tpu_custom_call.1} parent=11 // pred_region
          _
        $region32: #{tpu_custom_call.1} parent=11 // pred_fallthru
          _
        // Predicated region
        $region33: #{tpu_custom_call.1} parent=11 // pred_check
          %p464 = pneg %p209
        $region34: #{tpu_custom_call.1} parent=11 // pred_check_branch
          %466 = sbr.rel (%p464) target = $region36
        $region35: #{tpu_custom_call.1} parent=11 // pred_region
          _
        $region36: #{tpu_custom_call.1} parent=11 // pred_fallthru
          _
        // Predicated region
        $region37: #{tpu_custom_call.1} parent=11 // pred_check
          %p467 = pneg %p230
        $region38: #{tpu_custom_call.1} parent=11 // pred_check_branch
          %469 = sbr.rel (%p467) target = $region40
        $region39: #{tpu_custom_call.1} parent=11 // pred_region
          _
        $region40: #{tpu_custom_call.1} parent=11 // pred_fallthru
          _
        // Predicated region
        $region41: #{tpu_custom_call.1} parent=11 // pred_check
          %p470 = pneg %p251
        $region42: #{tpu_custom_call.1} parent=11 // pred_check_branch
          %472 = sbr.rel (%p470) target = $region44
        $region43: #{tpu_custom_call.1} parent=11 // pred_region
          _
        $region44: #{tpu_custom_call.1} parent=11 // pred_fallthru
          _
        // Predicated region
        $region45: #{tpu_custom_call.1} parent=11 // pred_check
          %p473 = pneg %p272
        $region46: #{tpu_custom_call.1} parent=11 // pred_check_branch
          %475 = sbr.rel (%p473) target = $region48
        $region47: #{tpu_custom_call.1} parent=11 // pred_region
          _
        $region48: #{tpu_custom_call.1} parent=11 // pred_fallthru
          _
        // Predicated region
        $region49: #{tpu_custom_call.1} parent=11 // pred_check
          %p476 = pneg %p293
        $region50: #{tpu_custom_call.1} parent=11 // pred_check_branch
          %478 = sbr.rel (%p476) target = $region52
        $region51: #{tpu_custom_call.1} parent=11 // pred_region
          _
        $region52: #{tpu_custom_call.1} parent=11 // pred_fallthru
          _
        // Predicated region
        $region53: #{tpu_custom_call.1} parent=11 // pred_check
          %p479 = pneg %p314
        $region54: #{tpu_custom_call.1} parent=11 // pred_check_branch
          %481 = sbr.rel (%p479) target = $region56
        $region55: #{tpu_custom_call.1} parent=11 // pred_region
          _
        $region56: #{tpu_custom_call.1} parent=11 // pred_fallthru
          _
        // Predicated region
        $region57: #{tpu_custom_call.1} parent=11 // pred_check
          %p482 = pneg %p335
        $region58: #{tpu_custom_call.1} parent=11 // pred_check_branch
          %484 = sbr.rel (%p482) target = $region60
        $region59: #{tpu_custom_call.1} parent=11 // pred_region
          _
        $region60: #{tpu_custom_call.1} parent=11 // pred_fallthru
          _
        // Predicated region
        $region61: #{tpu_custom_call.1} parent=11 // pred_check
          %p485 = pneg %p356
        $region62: #{tpu_custom_call.1} parent=11 // pred_check_branch
          %487 = sbr.rel (%p485) target = $region64
        $region63: #{tpu_custom_call.1} parent=11 // pred_region
          _
        $region64: #{tpu_custom_call.1} parent=11 // pred_fallthru
          _
      $region12: #{tpu_custom_call.1} parent=5 // pred_fallthru
        _
      %p488 = scmp.lt.s32.totalorder %s31, 2
      // Predicated region
      $region65: #{tpu_custom_call.1} parent=5 // pred_check
        %p489 = pneg %p488
      $region66: #{tpu_custom_call.1} parent=5 // pred_check_branch
        %491 = sbr.rel (%p489) target = $region68
      $region67: #{tpu_custom_call.1} parent=5 // pred_region
        // Predicated region
        $region69: #{tpu_custom_call.1} parent=67 // pred_check
          %p492 = pneg %p51
        $region70: #{tpu_custom_call.1} parent=67 // pred_check_branch
          %494 = sbr.rel (%p492) target = $region72
        $region71: #{tpu_custom_call.1} parent=67 // pred_region
          %p495 = scmp.lt.s32.totalorder %s31, 1
          %s496 = scalar_select %p495, %s31, 1
          %s497 = smul.addr %s496, 4
          %s498 = smul.addr %s497, 8
          %s499 = scalar_lea.vmem %s0, %s498
        $region72: #{tpu_custom_call.1} parent=67 // pred_fallthru
          _
        // Predicated region
        $region73: #{tpu_custom_call.1} parent=67 // pred_check
          %p500 = pneg %p77
        $region74: #{tpu_custom_call.1} parent=67 // pred_check_branch
          %502 = sbr.rel (%p500) target = $region76
        $region75: #{tpu_custom_call.1} parent=67 // pred_region
          %p503 = scmp.lt.s32.totalorder %s31, 1
          %s504 = scalar_select %p503, %s31, 1
          %s505 = smul.addr %s504, 4
          %s506 = smul.addr %s505, 8
          %s507 = scalar_lea.vmem %s1, %s506
        $region76: #{tpu_custom_call.1} parent=67 // pred_fallthru
          _
      $region68: #{tpu_custom_call.1} parent=5 // pred_fallthru
        _
      %p508 = scmp.le.s32.totalorder 1, %s31
      %p509 = scmp.lt.s32.totalorder %s31, 3
      %p510 = pnand %p508, %p509
      %p511 = pneg %p510
      // Predicated region
      $region77: #{tpu_custom_call.1} parent=5 // pred_check
        _
      $region78: #{tpu_custom_call.1} parent=5 // pred_check_branch
        %513 = sbr.rel (%p510) target = $region80
      $region79: #{tpu_custom_call.1} parent=5 // pred_region
        %s514 = ssub.s32 %s31, 1
        %p515 = scmp.lt.s32.totalorder %s36, 1
        %s516 = scalar_select %p515, %s36, 1
        %s517 = smul.addr %s516, 4
        %s518 = smul.addr %s517, 8
        %s519 = scalar_lea.vmem %s0, %s518
        %p520 = pneg %p57
        %p521 = pneg %p54
        %p522 = scmp.lt.s32.totalorder %s36, 1
        %s523 = scalar_select %p522, %s36, 1
        %s524 = smul.addr %s523, 4
        %s525 = smul.addr %s524, 8
        %s526 = scalar_lea.vmem %s1, %s525
        %p527 = pneg %p83
        %p528 = pneg %p80
        %p529 = pneg %p104
        %p530 = pneg %p101
        %p531 = pneg %p125
        %p532 = pneg %p122
        %p533 = pneg %p146
        %p534 = pneg %p143
        %p535 = pneg %p167
        %p536 = pneg %p164
        %p537 = pneg %p188
        %p538 = pneg %p185
        %p539 = pneg %p209
        %p540 = pneg %p206
        %p541 = pneg %p230
        %p542 = pneg %p227
        %p543 = pneg %p251
        %p544 = pneg %p248
        %p545 = pneg %p272
        %p546 = pneg %p269
        %p547 = pneg %p293
        %p548 = pneg %p290
        %p549 = pneg %p314
        %p550 = pneg %p311
        %p551 = pneg %p335
        %p552 = pneg %p332
        %p553 = pneg %p356
        %p554 = pneg %p353
        %p555 = pneg %p382
        %p556 = pneg %p379
        %s557 = sand.u32 %s369, 1
        %s558 = scalar_lea.sflag [#allocation4], %s557
        %s559 = sand.u32 %s369, 1
        %s560 = smul.addr %s559, 32
        %s561 = scalar_lea.vmem [#allocation3], %s560
        %p562 = pneg %p408
        %p563 = pneg %p405
        %s564 = sand.u32 %s36, 1
        %s565 = scalar_lea.sflag [#allocation6], %s564
        %s566 = sand.u32 %s395, 1
        %s567 = smul.addr %s566, 32
        %s568 = scalar_lea.vmem [#allocation5], %s567
        %p569 = pneg %p434
        %p570 = pneg %p431
        %s571 = sand.u32 %s36, 1
        %s572 = scalar_lea.sflag [#allocation6], %s571
        %s573 = sand.u32 %s421, 1
        %s574 = smul.addr %s573, 32
        %s575 = scalar_lea.vmem [#allocation7], %s574
        %p576 = scmp.lt.s32.totalorder %s36, 1
        %s577 = scalar_select %p576, %s36, 1
        %s578 = smul.addr %s577, 4
        %s579 = smul.addr %s578, 8
        %s580 = scalar_lea.vmem %s0, %s579
        %p581 = scmp.lt.s32.totalorder %s36, 1
        %s582 = scalar_select %p581, %s36, 1
        %s583 = smul.addr %s582, 4
        %s584 = smul.addr %s583, 8
        %s585 = scalar_lea.vmem %s1, %s584
        %v586 = vld [vmem:[%s580] sm:$0xff]
        %v587 = vld [vmem:[%s580 + $0x8] sm:$0xff]
        %v588 = vld [vmem:[%s580 + $0x10] sm:$0xff]
        %v589 = vld [vmem:[%s580 + $0x18] sm:$0xff]
        %v590 = vld [vmem:[%s585] sm:$0xff]
        %v591 = vld [vmem:[%s585 + $0x8] sm:$0xff]
        %v592 = vld [vmem:[%s585 + $0x10] sm:$0xff]
        %v593 = vld [vmem:[%s585 + $0x18] sm:$0xff]
        %v594 = vadd.f32 %v586, %v587
        %595 = vadd.xlane.f32.xlu0 %v594
        %v596 = vpop.xlane.xlu0 %595
        %v597 = vadd.f32 %v588, %v589
        %598 = vadd.xlane.f32.xlu0 %v597
        %v599 = vpop.xlane.xlu0 %598
        %v600 = vmul.f32 %v596, 0.00390625
        %v601 = vmul.f32 %v599, 0.00390625
        %v602 = vadd.f32 %v590, %v591
        %603 = vadd.xlane.f32.xlu0 %v602
        %v604 = vpop.xlane.xlu0 %603
        %v605 = vadd.f32 %v592, %v593
        %606 = vadd.xlane.f32.xlu0 %v605
        %v607 = vpop.xlane.xlu0 %606
        %v608 = vmul.f32 %v604, 0.00390625
        %v609 = vmul.f32 %v607, 0.00390625
        %v610 = vld [vmem:[%s2] sm:$0xff]
        %v611 = vld [vmem:[%s2 + $0x8] sm:$0xff]
        %v612 = vld [vmem:[%s3] sm:$0xff]
        %v613 = vld [vmem:[%s3 + $0x8] sm:$0xff]
        %v614 = vld [vmem:[%s4] sm:$0x1]
        %v615 = vld [vmem:[%s5] sm:$0xff]
        %v616 = vld [vmem:[%s5 + $0x8] sm:$0xff]
        %v617 = vld [vmem:[%s6] sm:$0xff]
        %v618 = vld [vmem:[%s6 + $0x8] sm:$0xff]
        %v619 = vmul.f32 %v608, %v610
        %v620 = vmul.f32 %v609, %v611
        %vm621 = vcmask 31744
        %v622 = vsel %vm621, %v619, 0.0
        %v623 = vsel %vm621, %v620, 0.0
        %v624 = vadd.f32 %v622, %v623
        %v625 = vrot.slane %v624, 4
        %v626 = vadd.f32 %v624, %v625
        %v627 = vrot.slane %v626, 2
        %v628 = vadd.f32 %v626, %v627
        %v629 = vrot.slane %v628, 1
        %v630 = vadd.f32 %v628, %v629
        %v631 = vmul.f32 %v600, %v612
        %v632 = vmul.f32 %v601, %v613
        %v633 = vsel %vm621, %v631, 0.0
        %v634 = vsel %vm621, %v632, 0.0
        %v635 = vadd.f32 %v633, %v634
        %v636 = vrot.slane %v635, 4
        %v637 = vadd.f32 %v635, %v636
        %v638 = vrot.slane %v637, 2
        %v639 = vadd.f32 %v637, %v638
        %v640 = vrot.slane %v639, 1
        %v641 = vadd.f32 %v639, %v640
        %v642 = vadd.f32 %v630, %v641
        %v643 = vadd.f32 %v642, %v614
        %v644 = vmax.f32 %v643, 0.0
        %v645 = vlaneseq
        %v646 = vshrl.u32 %v645, 7
        %v647 = vsub.s32 0, %v646
        %v648 = vrot.slane %v644, %v647
        %v649 = vmul.f32 %v648, %v615
        %v650 = vmul.f32 %v648, %v616
        %v651 = vsel %vm621, %v649, 0.0
        %652 = vadd.xlane.f32.xlu0 %v651
        %v653 = vpop.xlane.xlu0 %652
        %v654 = vsel %vm621, %v650, 0.0
        %655 = vadd.xlane.f32.xlu0 %v654
        %v656 = vpop.xlane.xlu0 %655
        %v657 = vadd.f32 %v653, %v617
        %v658 = vadd.f32 %v656, %v618
        %v659 = vxor.u32 %v657, 2147483648
        %v660 = vxor.u32 %v658, 2147483648
        %v661 = vmul.f32 %v659, 1.442695
        %v662 = vpow.pop %v661
        %v663 = vmul.f32 %v660, 1.442695
        %v664 = vpow.pop %v663
        %v665 = vadd.f32 %v662, 1.0
        %v666 = vadd.f32 %v664, 1.0
        %v667 = vrcp.pop %v665
        %v668 = vmul.f32 1.0, %v667
        %v669 = vrcp.pop %v666
        %v670 = vmul.f32 1.0, %v669
        %v671 = vld [vmem:[%s7] sm:$0xff]
        %v672 = vld [vmem:[%s7 + $0x8] sm:$0xff]
        %v673 = vld [vmem:[%s8] sm:$0xff]
        %v674 = vld [vmem:[%s8 + $0x8] sm:$0xff]
        %v675 = vld [vmem:[%s9] sm:$0x1]
        %v676 = vld [vmem:[%s10] sm:$0xff]
        %v677 = vld [vmem:[%s10 + $0x8] sm:$0xff]
        %v678 = vld [vmem:[%s11] sm:$0xff]
        %v679 = vld [vmem:[%s11 + $0x8] sm:$0xff]
        %v680 = vmul.f32 %v600, %v671
        %v681 = vmul.f32 %v601, %v672
        %v682 = vsel %vm621, %v680, 0.0
        %v683 = vsel %vm621, %v681, 0.0
        %v684 = vadd.f32 %v682, %v683
        %v685 = vrot.slane %v684, 4
        %v686 = vadd.f32 %v684, %v685
        %v687 = vrot.slane %v686, 2
        %v688 = vadd.f32 %v686, %v687
        %v689 = vrot.slane %v688, 1
        %v690 = vadd.f32 %v688, %v689
        %v691 = vmul.f32 %v608, %v673
        %v692 = vmul.f32 %v609, %v674
        %v693 = vsel %vm621, %v691, 0.0
        %v694 = vsel %vm621, %v692, 0.0
        %v695 = vadd.f32 %v693, %v694
        %v696 = vrot.slane %v695, 4
        %v697 = vadd.f32 %v695, %v696
        %v698 = vrot.slane %v697, 2
        %v699 = vadd.f32 %v697, %v698
        %v700 = vrot.slane %v699, 1
        %v701 = vadd.f32 %v699, %v700
        %v702 = vadd.f32 %v690, %v701
        %v703 = vadd.f32 %v702, %v675
        %v704 = vmax.f32 %v703, 0.0
        %v705 = vlaneseq
        %v706 = vshrl.u32 %v705, 7
        %v707 = vsub.s32 0, %v706
        %v708 = vrot.slane %v704, %v707
        %v709 = vmul.f32 %v708, %v676
        %v710 = vmul.f32 %v708, %v677
        %v711 = vsel %vm621, %v709, 0.0
        %712 = vadd.xlane.f32.xlu0 %v711
        %v713 = vpop.xlane.xlu0 %712
        %v714 = vsel %vm621, %v710, 0.0
        %715 = vadd.xlane.f32.xlu0 %v714
        %v716 = vpop.xlane.xlu0 %715
        %v717 = vadd.f32 %v713, %v678
        %v718 = vadd.f32 %v716, %v679
        %v719 = vxor.u32 %v717, 2147483648
        %v720 = vxor.u32 %v718, 2147483648
        %v721 = vmul.f32 %v719, 1.442695
        %v722 = vpow.pop %v721
        %v723 = vmul.f32 %v720, 1.442695
        %v724 = vpow.pop %v723
        %v725 = vadd.f32 %v722, 1.0
        %v726 = vadd.f32 %v724, 1.0
        %v727 = vrcp.pop %v725
        %v728 = vmul.f32 1.0, %v727
        %v729 = vrcp.pop %v726
        %v730 = vmul.f32 1.0, %v729
        %v731 = vld [vmem:[%s12] sm:$0xff]
        %v732 = vld [vmem:[%s12 + $0x8] sm:$0xff]
        %v733 = vld [vmem:[%s13] sm:$0xff]
        %v734 = vld [vmem:[%s13 + $0x8] sm:$0xff]
        %v735 = vmul.f32 %v733, %v728
        %v736 = vmul.f32 %v734, %v730
        %v737 = vadd.f32 %v731, %v735
        %v738 = vadd.f32 %v732, %v736
        %v739 = vmul.f32 %v731, %v668
        %v740 = vmul.f32 %v732, %v670
        %v741 = vadd.f32 %v733, %v739
        %v742 = vadd.f32 %v734, %v740
        %744 = vset.pattern.permute.xlu0 0
        %745 = vperm.xlu0 %744, %v737
        %v746 = vpop.permute.xlu0 %745
        %749 = vset.pattern.permute.xlu0 0
        %750 = vperm.xlu0 %749, %v738
        %v751 = vpop.permute.xlu0 %750
        %v753 = vmul.f32 %v586, %v746
        %v754 = vmul.f32 %v587, %v746
        %v755 = vmul.f32 %v588, %v751
        %v756 = vmul.f32 %v589, %v751
        %758 = vset.pattern.permute.xlu0 0
        %759 = vperm.xlu0 %758, %v741
        %v760 = vpop.permute.xlu0 %759
        %763 = vset.pattern.permute.xlu0 0
        %764 = vperm.xlu0 %763, %v742
        %v765 = vpop.permute.xlu0 %764
        %v767 = vmul.f32 %v590, %v760
        %v768 = vmul.f32 %v591, %v760
        %v769 = vmul.f32 %v592, %v765
        %v770 = vmul.f32 %v593, %v765
        %v771 = vadd.f32 %v753, %v767
        %v772 = vadd.f32 %v754, %v768
        %v773 = vadd.f32 %v755, %v769
        %v774 = vadd.f32 %v756, %v770
        %v775 = vadd.f32 %v771, %v773
        %v776 = vrot.slane %v775, 4
        %v777 = vadd.f32 %v775, %v776
        %v778 = vrot.slane %v777, 2
        %v779 = vadd.f32 %v777, %v778
        %v780 = vrot.slane %v779, 1
        %v781 = vadd.f32 %v779, %v780
        %v782 = vadd.f32 %v772, %v774
        %v783 = vrot.slane %v782, 4
        %v784 = vadd.f32 %v782, %v783
        %v785 = vrot.slane %v784, 2
        %v786 = vadd.f32 %v784, %v785
        %v787 = vrot.slane %v786, 1
        %v788 = vadd.f32 %v786, %v787
        %s789 = sld [smem:[#allocation2]]
        %v790 = vstv %s789
        %v791 = vadd.f32 %v781, %v790
        %v792 = vadd.f32 %v788, %v790
        %v793 = vxor.u32 %v791, 2147483648
        %v794 = vxor.u32 %v792, 2147483648
        %v795 = vmul.f32 %v793, 1.442695
        %v796 = vpow.pop %v795
        %v797 = vmul.f32 %v794, 1.442695
        %v798 = vpow.pop %v797
        %v799 = vadd.f32 %v796, 1.0
        %v800 = vadd.f32 %v798, 1.0
        %v801 = vrcp.pop %v799
        %v802 = vmul.f32 1.0, %v801
        %v803 = vrcp.pop %v800
        %v804 = vmul.f32 1.0, %v803
        %v805 = vmul.f32 %v586, %v802
        %v806 = vmul.f32 %v587, %v804
        %v807 = vmul.f32 %v588, %v802
        %v808 = vmul.f32 %v589, %v804
        %v809 = vsub.f32 1.0, %v802
        %v810 = vsub.f32 1.0, %v804
        %v811 = vmul.f32 %v590, %v809
        %v812 = vmul.f32 %v591, %v810
        %v813 = vmul.f32 %v592, %v809
        %v814 = vmul.f32 %v593, %v810
        %v815 = vadd.f32 %v805, %v811
        %v816 = vadd.f32 %v806, %v812
        %v817 = vadd.f32 %v807, %v813
        %v818 = vadd.f32 %v808, %v814
        %819 = vst [vmem:[%s575] sm:$0xff] %v815
        %820 = vst [vmem:[%s575 + $0x8] sm:$0xff] %v816
        %821 = vst [vmem:[%s575 + $0x10] sm:$0xff] %v817
        %822 = vst [vmem:[%s575 + $0x18] sm:$0xff] %v818
        %v823 = vadd.f32 %v586, %v815
        %v824 = vadd.f32 %v587, %v816
        %v825 = vadd.f32 %v588, %v817
        %v826 = vadd.f32 %v589, %v818
        %v827 = vmul.f32 %v823, 0.5
        %v828 = vmul.f32 %v824, 0.5
        %v829 = vmul.f32 %v825, 0.5
        %v830 = vmul.f32 %v826, 0.5
        %v831 = vmax.f32 %v827, 0.0
        %v832 = vmax.f32 %v828, 0.0
        %v833 = vmax.f32 %v829, 0.0
        %v834 = vmax.f32 %v830, 0.0
        %835 = vst [vmem:[%s561] sm:$0xff] %v831
        %836 = vst [vmem:[%s561 + $0x8] sm:$0xff] %v832
        %837 = vst [vmem:[%s561 + $0x10] sm:$0xff] %v833
        %838 = vst [vmem:[%s561 + $0x18] sm:$0xff] %v834
        %v839 = vadd.f32 %v590, %v815
        %v840 = vadd.f32 %v591, %v816
        %v841 = vadd.f32 %v592, %v817
        %v842 = vadd.f32 %v593, %v818
        %v843 = vmul.f32 %v839, 0.5
        %v844 = vmul.f32 %v840, 0.5
        %v845 = vmul.f32 %v841, 0.5
        %v846 = vmul.f32 %v842, 0.5
        %v847 = vmax.f32 %v843, 0.0
        %v848 = vmax.f32 %v844, 0.0
        %v849 = vmax.f32 %v845, 0.0
        %v850 = vmax.f32 %v846, 0.0
        %851 = vst [vmem:[%s568] sm:$0xff] %v847
        %852 = vst [vmem:[%s568 + $0x8] sm:$0xff] %v848
        %853 = vst [vmem:[%s568 + $0x10] sm:$0xff] %v849
        %854 = vst [vmem:[%s568 + $0x18] sm:$0xff] %v850
        %s855 = sand.u32 %s369, 1
        %s856 = scalar_lea.sflag [#allocation4], %s855
        %s857 = sand.u32 %s369, 1
        %s858 = smul.addr %s857, 32
        %s859 = scalar_lea.vmem [#allocation3], %s858
        %s860 = sand.u32 %s36, 1
        %s861 = scalar_lea.sflag [#allocation6], %s860
        %s862 = sand.u32 %s395, 1
        %s863 = smul.addr %s862, 32
        %s864 = scalar_lea.vmem [#allocation5], %s863
        %s865 = sand.u32 %s36, 1
        %s866 = scalar_lea.sflag [#allocation6], %s865
        %s867 = sand.u32 %s421, 1
        %s868 = smul.addr %s867, 32
        %s869 = scalar_lea.vmem [#allocation7], %s868
        // Predicated region
        $region81: #{tpu_custom_call.1} parent=79 // pred_check
          %p870 = pneg %p379
        $region82: #{tpu_custom_call.1} parent=79 // pred_check_branch
          %872 = sbr.rel (%p870) target = $region84
        $region83: #{tpu_custom_call.1} parent=79 // pred_region
          %s874 = ssub.s32 512, 512
          %875 = vsyncadd %s856, %s874
          %s876 = smul.addr %s36, 4
          %s877 = smul.addr %s876, 128
          %s878 = scalar_lea.hbm %s15, %s877
          %s879 = sshll.u32 %s859, 4
          %s880 = int_to_ptr.vmem [resolvable:$true] %s879
          %885 = dma.vmem_to_hbm [thread:$0]  %s880, 512, %s878, %s856, 256, 256, 16
        $region84: #{tpu_custom_call.1} parent=79 // pred_fallthru
          _
        // Predicated region
        $region85: #{tpu_custom_call.1} parent=79 // pred_check
          %p886 = pneg %p405
        $region86: #{tpu_custom_call.1} parent=79 // pred_check_branch
          %888 = sbr.rel (%p886) target = $region88
        $region87: #{tpu_custom_call.1} parent=79 // pred_region
          %s890 = ssub.s32 512, 512
          %891 = vsyncadd %s861, %s890
          %s892 = smul.addr %s36, 4
          %s893 = smul.addr %s892, 128
          %s894 = scalar_lea.hbm %s16, %s893
          %s895 = sshll.u32 %s864, 4
          %s896 = int_to_ptr.vmem [resolvable:$true] %s895
          %901 = dma.vmem_to_hbm [thread:$0]  %s896, 512, %s894, %s861, 256, 256, 16
        $region88: #{tpu_custom_call.1} parent=79 // pred_fallthru
          _
        // Predicated region
        $region89: #{tpu_custom_call.1} parent=79 // pred_check
          %p902 = pneg %p431
        $region90: #{tpu_custom_call.1} parent=79 // pred_check_branch
          %904 = sbr.rel (%p902) target = $region92
        $region91: #{tpu_custom_call.1} parent=79 // pred_region
          %s906 = ssub.s32 512, 512
          %907 = vsyncadd %s866, %s906
          %s908 = smul.addr %s36, 4
          %s909 = smul.addr %s908, 128
          %s910 = scalar_lea.hbm %s17, %s909
          %s911 = sshll.u32 %s869, 4
          %s912 = int_to_ptr.vmem [resolvable:$true] %s911
          %917 = dma.vmem_to_hbm [thread:$0]  %s912, 512, %s910, %s866, 256, 256, 16
        $region92: #{tpu_custom_call.1} parent=79 // pred_fallthru
          _
      $region80: #{tpu_custom_call.1} parent=5 // pred_fallthru
        _
      %p918 = scmp.le.s32.totalorder 2, %s31
      // Predicated region
      $region93: #{tpu_custom_call.1} parent=5 // pred_check
        %p919 = pneg %p918
      $region94: #{tpu_custom_call.1} parent=5 // pred_check_branch
        %921 = sbr.rel (%p919) target = $region96
      $region95: #{tpu_custom_call.1} parent=5 // pred_region
        %s922 = ssub.s32 %s31, 2
        // Predicated region
        $region97: #{tpu_custom_call.1} parent=95 // pred_check
          %p923 = pneg %p385
        $region98: #{tpu_custom_call.1} parent=95 // pred_check_branch
          %925 = sbr.rel (%p923) target = $region100
        $region99: #{tpu_custom_call.1} parent=95 // pred_region
          %s926 = sand.u32 %s370, 1
          %s927 = scalar_lea.sflag [#allocation4], %s926
          %s928 = sand.u32 %s370, 1
          %s929 = smul.addr %s928, 32
          %s930 = scalar_lea.vmem [#allocation3], %s929
          %931 = dma.done %s927, 512
        $region100: #{tpu_custom_call.1} parent=95 // pred_fallthru
          _
        // Predicated region
        $region101: #{tpu_custom_call.1} parent=95 // pred_check
          %p932 = pneg %p411
        $region102: #{tpu_custom_call.1} parent=95 // pred_check_branch
          %934 = sbr.rel (%p932) target = $region104
        $region103: #{tpu_custom_call.1} parent=95 // pred_region
          %s935 = sand.u32 %s37, 1
          %s936 = scalar_lea.sflag [#allocation6], %s935
          %s937 = sand.u32 %s396, 1
          %s938 = smul.addr %s937, 32
          %s939 = scalar_lea.vmem [#allocation5], %s938
          %940 = dma.done %s936, 512
        $region104: #{tpu_custom_call.1} parent=95 // pred_fallthru
          _
        // Predicated region
        $region105: #{tpu_custom_call.1} parent=95 // pred_check
          %p941 = pneg %p437
        $region106: #{tpu_custom_call.1} parent=95 // pred_check_branch
          %943 = sbr.rel (%p941) target = $region108
        $region107: #{tpu_custom_call.1} parent=95 // pred_region
          %s944 = sand.u32 %s37, 1
          %s945 = scalar_lea.sflag [#allocation6], %s944
          %s946 = sand.u32 %s422, 1
          %s947 = smul.addr %s946, 32
          %s948 = scalar_lea.vmem [#allocation7], %s947
          %949 = dma.done %s945, 512
        $region108: #{tpu_custom_call.1} parent=95 // pred_fallthru
          _
      $region96: #{tpu_custom_call.1} parent=5 // pred_fallthru
        _
    $region6: #{tpu_custom_call.1} parent=1 // loop_footer
      %s35 = sadd.s32 1, %s31
    $region7: #{tpu_custom_call.1} parent=1 // loop_footer_branch
      %30 = sbr.rel target = $region3
    $region8: #{tpu_custom_call.1} parent=1 // loop_exit
      _
    %950 = vsyncpa [#allocation4], 1
    %s951 = scalar_lea.sflag [#allocation4], 1
    %952 = vsyncpa %s951, 1
    %953 = vsyncpa [#allocation6], 1
    %s954 = scalar_lea.sflag [#allocation6], 1
    %955 = vsyncpa %s954, 1

</llo_original>
